<compile_context>
chip_gen: v6e
topology: v6e:2x2x1
jax: 0.10.0
libtpu: 0.0.40
codegen_flags: <defaults>
</compile_context>

<pallas_src>
import jax
import jax.numpy as jnp
from jax.experimental import pallas as pl
from jax.experimental.pallas import tpu as pltpu


def _round_up(x, m):
    return ((x + m - 1) // m) * m


def _cdiv(a, b):
    return -(-a // b)


def _balanced_tile(dim, max_tile, align):
    """Largest align-multiple tile <= round_up(max_tile, align) that minimizes
    padding of `dim` (batch=300, max_tile=256 -> tile=152, pad=4; not tile=256,
    pad=212)."""
    max_tile = max(align, _round_up(max_tile, align))
    num_tiles = _cdiv(dim, max_tile)
    return _round_up(_cdiv(dim, num_tiles), align)


def _sublane_align(dtype):
    return {4: 8, 2: 16, 1: 32}.get(jnp.dtype(dtype).itemsize, 8)


def prepare_stiefel_weight(weight):
    """One-time layout plumbing: (out_features, in_features) -> (in_features, out_features).

    Cache the result at init / on weight update and pass it as weight_t= to
    stiefel_linear so the forward pass does no per-call transpose of W.
    """
    return weight.T


# ----------------------------- kernels ---------------------------------------


def _make_single_block_kernel(has_bias):
    # Whole problem in one VMEM block: o = x @ w_t (+ b).
    if has_bias:
        def kernel(x_ref, w_ref, b_ref, o_ref):
            acc = jnp.dot(x_ref[...], w_ref[...], preferred_element_type=jnp.float32)
            o_ref[...] = (acc + b_ref[...].astype(jnp.float32)).astype(o_ref.dtype)
        return kernel

    def kernel(x_ref, w_ref, o_ref):
        acc = jnp.dot(x_ref[...], w_ref[...], preferred_element_type=jnp.float32)
        o_ref[...] = acc.astype(o_ref.dtype)
    return kernel


def _make_tiled_kernel(has_bias, direct_out):
    # x_ref: (TM, TK), w_ref: (TK, TN), b_ref: (1, TN), o_ref: (TM, TN).
    if direct_out:
        # f32 output: accumulate straight into the resident output block; the
        # bias (or zero) is the k==0 initializer. No scratch, no extra VMEM
        # read+write at the last K step.
        def body(x_ref, w_ref, b_ref, o_ref):
            k = pl.program_id(2)

            @pl.when(k == 0)
            def _():
                if has_bias:
                    o_ref[...] = jnp.broadcast_to(
                        b_ref[...].astype(jnp.float32), o_ref.shape)
                else:
                    o_ref[...] = jnp.zeros_like(o_ref)

            o_ref[...] += jnp.dot(x_ref[...], w_ref[...],
                                  preferred_element_type=jnp.float32)

        if has_bias:
            return body
        return lambda x_ref, w_ref, o_ref: body(x_ref, w_ref, None, o_ref)

    # Low-precision output: keep an f32 VMEM accumulator.
    def body_acc(x_ref, w_ref, b_ref, o_ref, acc_ref):
        k = pl.program_id(2)

        @pl.when(k == 0)
        def _():
            acc_ref[...] = jnp.zeros_like(acc_ref)

        acc_ref[...] += jnp.dot(x_ref[...], w_ref[...],
                                preferred_element_type=jnp.float32)

        @pl.when(k == pl.num_programs(2) - 1)
        def _():
            res = acc_ref[...]
            if has_bias:
                res = res + b_ref[...].astype(jnp.float32)
            o_ref[...] = res.astype(o_ref.dtype)

    if has_bias:
        return body_acc
    return lambda x_ref, w_ref, o_ref, acc_ref: body_acc(x_ref, w_ref, None, o_ref, acc_ref)


# ----------------------------- wrapper ---------------------------------------

_SINGLE_BLOCK_MAX_ELEMS = 1 << 19  # ~2 MiB of f32 total operands + output.


def stiefel_linear(x, weight, bias=None, *, weight_t=None, tm=512, tn=512, tk=1024):
    """y = x @ weight.T + bias  (PyTorch F.linear semantics).

    x: (..., in_features); weight: (out_features, in_features);
    bias: (out_features,) or None; weight_t: optional cached weight.T of shape
    (in_features, out_features) -- see prepare_stiefel_weight().
    """
    orig_shape = x.shape
    out_features, in_features = weight.shape
    x2d = x.reshape(-1, in_features)
    batch = x2d.shape[0]
    out_dtype = x2d.dtype
    has_bias = bias is not None

    if weight_t is None:
        weight_t = weight.T  # (in_features, out_features); cache via prepare_stiefel_weight.

    # ---- tiny-problem bypass: single block, no padding, no grid machinery ----
    total_elems = batch * in_features + in_features * out_features + batch * out_features
    if total_elems <= _SINGLE_BLOCK_MAX_ELEMS:
        operands = [x2d, weight_t]
        in_specs = [
            pl.BlockSpec((batch, in_features), lambda i: (0, 0)),
            pl.BlockSpec((in_features, out_features), lambda i: (0, 0)),
        ]
        if has_bias:
            operands.append(bias.reshape(1, out_features))
            in_specs.append(pl.BlockSpec((1, out_features), lambda i: (0, 0)))
        out = pl.pallas_call(
            _make_single_block_kernel(has_bias),
            out_shape=jax.ShapeDtypeStruct((batch, out_features), out_dtype),
            grid=(1,),
            in_specs=in_specs,
            out_specs=pl.BlockSpec((batch, out_features), lambda i: (0, 0)),
        )(*operands)
        return out.reshape(orig_shape[:-1] + (out_features,))

    # ---- tiled path -----------------------------------------------------------
    sub = _sublane_align(out_dtype)

    # Balanced tiles: minimize edge padding instead of naively clamping.
    tm = _balanced_tile(batch, tm, sub)
    tk = _balanced_tile(in_features, tk, 128)
    tn = _balanced_tile(out_features, tn, 128)

    mp = _round_up(batch, tm)
    kp = _round_up(in_features, tk)
    npad = _round_up(out_features, tn)
    grid_m, grid_n, grid_k = mp // tm, npad // tn, kp // tk

    # v7x has 2 TensorCores: make sure at least one "parallel" axis has extent >= 2.
    if grid_m == 1 and grid_n == 1:
        if mp >= 2 * sub:
            tm = _balanced_tile(batch, _cdiv(mp, 2), sub)
            mp = _round_up(batch, tm)
            grid_m = mp // tm
        elif npad >= 256:
            tn = _balanced_tile(out_features, npad // 2, 128)
            npad = _round_up(out_features, tn)
            grid_n = npad // tn

    # Zero-pad only when actually required (aligned shapes skip the HBM copies).
    if mp == batch and kp == in_features:
        x_p = x2d
    else:
        x_p = jnp.zeros((mp, kp), x2d.dtype).at[:batch, :in_features].set(x2d)
    if kp == in_features and npad == out_features:
        w_p = weight_t
    else:
        w_p = jnp.zeros((kp, npad), weight_t.dtype).at[:in_features, :out_features].set(weight_t)

    operands = [x_p, w_p]
    in_specs = [
        pl.BlockSpec((tm, tk), lambda i, j, k: (i, k)),
        pl.BlockSpec((tk, tn), lambda i, j, k: (k, j)),
    ]
    bias_bytes = 0
    if has_bias:
        if npad == out_features:
            b_p = bias.reshape(1, out_features)
        else:
            b_p = jnp.zeros((1, npad), bias.dtype).at[0, :out_features].set(bias)
        operands.append(b_p)
        in_specs.append(pl.BlockSpec((1, tn), lambda i, j, k: (0, j)))
        bias_bytes = npad * jnp.dtype(bias.dtype).itemsize

    direct_out = jnp.dtype(out_dtype) == jnp.float32
    scratch_shapes = [] if direct_out else [pltpu.VMEM((tm, tn), jnp.float32)]

    x_bytes = mp * kp * jnp.dtype(x2d.dtype).itemsize
    w_bytes = kp * npad * jnp.dtype(weight_t.dtype).itemsize
    o_bytes = mp * npad * jnp.dtype(out_dtype).itemsize
    cost = pl.CostEstimate(
        flops=2 * mp * npad * kp,
        transcendentals=0,
        # x is streamed once per N tile, W once per M tile (actual reuse pattern).
        bytes_accessed=(x_bytes * grid_n + w_bytes * grid_m
                        + bias_bytes * grid_m * grid_n + o_bytes),
    )

    out = pl.pallas_call(
        _make_tiled_kernel(has_bias, direct_out),
        out_shape=jax.ShapeDtypeStruct((mp, npad), out_dtype),
        grid_spec=pltpu.PrefetchScalarGridSpec(
            num_scalar_prefetch=0,
            grid=(grid_m, grid_n, grid_k),
            in_specs=in_specs,
            out_specs=pl.BlockSpec((tm, tn), lambda i, j, k: (i, j)),
            scratch_shapes=scratch_shapes,
        ),
        compiler_params=pltpu.CompilerParams(
            dimension_semantics=("parallel", "parallel", "arbitrary"),
            # Above v5e's 16 MiB scoped default, well below v7x's 64 MiB physical.
            # TODO(synk): bump x/w pipeline depth (pl.Buffered(3)) if a v7x profile
            # shows exposed DMA at the start of each (i, j) pass.
            vmem_limit_bytes=48 * 1024 * 1024,
        ),
        cost_estimate=cost,
    )(*operands)

    out = out[:batch, :out_features]
    return out.reshape(orig_shape[:-1] + (out_features,))


if __name__ == "__main__":
    # Module config (defaults): in_features=32, out_features=16, bias=True,
    # init_eye=True (weight = eye on (out, in)), init_zero=True (bias = 0).
    in_features, out_features, batch = 32, 16, 8
    weight = jnp.eye(out_features, in_features, dtype=jnp.float32)
    bias = jnp.zeros((out_features,), dtype=jnp.float32)
    x = jax.random.normal(jax.random.PRNGKey(0), (batch, in_features), dtype=jnp.float32)

    y = jax.block_until_ready(stiefel_linear(x, weight, bias))
    y_ref = x @ weight.T + bias
    assert y.shape == (batch, out_features)
    assert jnp.allclose(y, y_ref, atol=1e-5, rtol=1e-5)

    # Tiled path: padded edges on all axes, multi-step K accumulation, bias
    # tracking the N tile, pre-transposed (cached) weight, f32 direct-out kernel.
    kx, kw, kb = jax.random.split(jax.random.PRNGKey(0), 3)
    x2 = jax.random.normal(kx, (520, 640), dtype=jnp.float32)
    w2 = jax.random.normal(kw, (400, 640), dtype=jnp.float32)
    b2 = jax.random.normal(kb, (400,), dtype=jnp.float32)
    w2_t = prepare_stiefel_weight(w2)
    y2 = jax.block_until_ready(
        stiefel_linear(x2, w2, b2, weight_t=w2_t, tm=256, tn=256, tk=256))
    y2_ref = jnp.dot(x2, w2.T, precision=jax.lax.Precision.HIGHEST) + b2
    assert y2.shape == (520, 400)
    rel_err = jnp.max(jnp.abs(y2 - y2_ref)) / jnp.max(jnp.abs(y2_ref))
    assert rel_err < 1e-2, rel_err

    # bf16 tiled path: f32 scratch accumulator kernel, no bias.
    x3 = x2.astype(jnp.bfloat16)
    w3 = w2.astype(jnp.bfloat16)
    y3 = jax.block_until_ready(stiefel_linear(x3, w3, None, tm=256, tn=256, tk=256))
    y3_ref = jnp.dot(x3.astype(jnp.float32), w3.astype(jnp.float32).T,
                     precision=jax.lax.Precision.HIGHEST)
    assert y3.dtype == jnp.bfloat16
    rel_err3 = jnp.max(jnp.abs(y3.astype(jnp.float32) - y3_ref)) / jnp.max(jnp.abs(y3_ref))
    assert rel_err3 < 2e-2, rel_err3

    print("KERNEL_OK")
</pallas_src>

<mosaic_0001>
module attributes {stable_mosaic.version = 11 : i64} {
  func.func @kernel(%arg0: i32, %arg1: memref<8x32xf32, #tpu.memory_space<vmem>>, %arg2: memref<32x16xf32, #tpu.memory_space<vmem>>, %arg3: memref<1x16xf32, #tpu.memory_space<vmem>>, %arg4: memref<8x16xf32, #tpu.memory_space<vmem>>) attributes {dimension_semantics = [#tpu.dimension_semantics<arbitrary>], iteration_bounds = array<i64: 1>, scalar_prefetch = 0 : i64, scratch_operands = 0 : i64, tpu.core_type = #tpu.core_type<tc>, window_params = [{pipeline_mode = #tpu.pipeline_mode<synchronous>, transform_indices = @transform_0, window_bounds = array<i64: 8, 32>}, {pipeline_mode = #tpu.pipeline_mode<synchronous>, transform_indices = @transform_1, window_bounds = array<i64: 32, 16>}, {pipeline_mode = #tpu.pipeline_mode<synchronous>, transform_indices = @transform_2, window_bounds = array<i64: 1, 16>}, {pipeline_mode = #tpu.pipeline_mode<synchronous>, transform_indices = @transform_3, window_bounds = array<i64: 8, 16>}]} {
    %c0 = arith.constant 0 : index
    %c0_0 = arith.constant 0 : index
    %0 = vector.load %arg1[%c0, %c0_0] : memref<8x32xf32, #tpu.memory_space<vmem>>, vector<8x32xf32>
    %c0_1 = arith.constant 0 : index
    %c0_2 = arith.constant 0 : index
    %1 = vector.load %arg2[%c0_1, %c0_2] : memref<32x16xf32, #tpu.memory_space<vmem>>, vector<32x16xf32>
    %cst = arith.constant dense<0.000000e+00> : vector<8x16xf32>
    %2 = tpu.matmul %0, %1, %cst {dimension_numbers = #tpu.dot_dimension_numbers<[1], [0], [0], [1], [0, 0, 1, 1], [], []>} : vector<8x32xf32>, vector<32x16xf32>, vector<8x16xf32> -> vector<8x16xf32>
    %c0_3 = arith.constant 0 : index
    %c0_4 = arith.constant 0 : index
    %3 = vector.load %arg3[%c0_3, %c0_4] : memref<1x16xf32, #tpu.memory_space<vmem>>, vector<1x16xf32>
    %4 = vector.broadcast %3 : vector<1x16xf32> to vector<8x16xf32>
    %5 = arith.addf %2, %4 : vector<8x16xf32>
    %c0_5 = arith.constant 0 : index
    %c0_6 = arith.constant 0 : index
    %6 = vector.load %arg4[%c0_5, %c0_6] : memref<8x16xf32, #tpu.memory_space<vmem>>, vector<8x16xf32>
    tpu.vector_store %arg4[%c0_5, %c0_6], %5 {strides = array<i32>} : memref<8x16xf32, #tpu.memory_space<vmem>>, vector<8x16xf32>,
    return
  }
  func.func @transform_0(%arg0: i32) -> (i32, i32) {
    %c0_i32 = arith.constant 0 : i32
    %c0_i32_0 = arith.constant 0 : i32
    %c0_i32_1 = arith.constant 0 : i32
    return %c0_i32, %c0_i32_0 : i32, i32
  }
  func.func @transform_1(%arg0: i32) -> (i32, i32) {
    %c0_i32 = arith.constant 0 : i32
    %c0_i32_0 = arith.constant 0 : i32
    %c0_i32_1 = arith.constant 0 : i32
    return %c0_i32, %c0_i32_0 : i32, i32
  }
  func.func @transform_2(%arg0: i32) -> (i32, i32) {
    %c0_i32 = arith.constant 0 : i32
    %c0_i32_0 = arith.constant 0 : i32
    %c0_i32_1 = arith.constant 0 : i32
    return %c0_i32, %c0_i32_0 : i32, i32
  }
  func.func @transform_3(%arg0: i32) -> (i32, i32) {
    %c0_i32 = arith.constant 0 : i32
    %c0_i32_0 = arith.constant 0 : i32
    %c0_i32_1 = arith.constant 0 : i32
    return %c0_i32, %c0_i32_0 : i32, i32
  }
}

</mosaic_0001>

<llo_original>
// kernel: tpu_custom_call.1
$region0: #{tpu_custom_call.1}
  #allocation0 [shape = 'u32[]', space=smem, size = 0x4, offset = 0x4, fixed_abs, tag = 'smem constant byte address 0x4 - core index']
  #allocation1 [shape = 'u32[144,128]{1,0:T(1,128)}', space=vmem, size = 0x12000, scoped, tag = 'internal scratch']
  %s0 = inlined_call_operand.vmem [shape: f32[8,32], index: 0, kind: input, shape index: {}]
  %s1 = inlined_call_operand.vmem [shape: f32[32,16], index: 1, kind: input, shape index: {}]
  %s2 = inlined_call_operand.vmem [shape: f32[1,16], index: 2, kind: input, shape index: {}]
  %s3 = inlined_call_operand.hbm [shape: f32[8,16], index: 3, kind: output, shape index: {}]
  %s4 = sld [smem:[#allocation0]]
  $region22: #{tpu_custom_call.1} parent=0
    _
  %s6 = ssub.s32 1, %s4
  %s7 = scalar_select 0, %s6, %s4
  $region1: #{tpu_custom_call.1} parent=0
    #allocation2 [shape = 'u8[4096]{0}', space=vmem, size = 0x1000, scoped, tag = 'output window, operand 0, single buffered']
    #allocation3 [shape = 's32[1]{0}', space=sflag, size = 0x4, scoped, tag = 'scoped memory for tpu_custom_call.1']
    %8 = vsyncpa [#allocation3], 0
    // Predicated region
    $region2: #{tpu_custom_call.1} parent=1 // pred_check
      _
    $region3: #{tpu_custom_call.1} parent=1 // pred_check_branch
      %10 = sbr.rel (0) target = $region5
    $region4: #{tpu_custom_call.1} parent=1 // pred_region
      _
    $region5: #{tpu_custom_call.1} parent=1 // pred_fallthru
      _
    // Predicated region
    $region6: #{tpu_custom_call.1} parent=1 // pred_check
      _
    $region7: #{tpu_custom_call.1} parent=1 // pred_check_branch
      %12 = sbr.rel (0) target = $region9
    $region8: #{tpu_custom_call.1} parent=1 // pred_region
      _
    $region9: #{tpu_custom_call.1} parent=1 // pred_fallthru
      _
    // Predicated region
    $region10: #{tpu_custom_call.1} parent=1 // pred_check
      _
    $region11: #{tpu_custom_call.1} parent=1 // pred_check_branch
      %14 = sbr.rel (0) target = $region13
    $region12: #{tpu_custom_call.1} parent=1 // pred_region
      _
    $region13: #{tpu_custom_call.1} parent=1 // pred_fallthru
      _
    %v15 = vld [vmem:[%s0] sm:$0xff]
    %v16 = vld [vmem:[%s1] sm:$0xff]
    %v17 = vld [vmem:[%s1 + $0x8] sm:$0xff]
    %v18 = vld [vmem:[%s1 + $0x10] sm:$0xff]
    %v19 = vld [vmem:[%s1 + $0x18] sm:$0xff]
    %v20 = vld [vmem:[%s2] sm:$0x1]
    %v22 = vlaneseq
    %v23 = vshrl.u32 %v22, 7
    %v24 = vsub.s32 0, %v23
    %v25 = vrot.slane %v20, %v24
    %vm27 = vcmask 261120
    %v29 = vsel %vm27, %v15, 0
    %31 = vmatprep.subr.mxu0 0.0
    %32 = vmatpush1.msra.mxu0 0.0
    %33 = vmatprep.subr.mxu0 0.0
    %34 = vmatpush1.msra.mxu0 0.0
    %35 = vmatprep.subr.mxu0 0.0
    %36 = vmatpush1.msra.mxu0 0.0
    %37 = vmatprep.subr.mxu0 0.0
    %38 = vmatpush1.msra.mxu0 0.0
    %39 = vmatprep.subr.mxu0 0.0
    %40 = vmatpush1.msra.mxu0 0.0
    %41 = vmatprep.subr.mxu0 0.0
    %42 = vmatpush1.msra.mxu0 0.0
    %43 = vmatprep.subr.mxu0 0.0
    %44 = vmatpush1.msra.mxu0 0.0
    %45 = vmatprep.subr.mxu0 0.0
    %46 = vmatpush1.msra.mxu0 0.0
    %47 = vmatprep.subr.mxu0 0.0
    %48 = vmatpush1.msra.mxu0 0.0
    %49 = vmatprep.subr.mxu0 0.0
    %50 = vmatpush1.msra.mxu0 0.0
    %51 = vmatprep.subr.mxu0 0.0
    %52 = vmatpush1.msra.mxu0 0.0
    %53 = vmatprep.subr.mxu0 0.0
    %54 = vmatpush1.msra.mxu0 0.0
    %55 = vmatprep.subr.mxu0 0.0
    %56 = vmatpush1.msra.mxu0 %v19
    %57 = vmatprep.subr.mxu0 0.0
    %58 = vmatpush1.msra.mxu0 %v18
    %59 = vmatprep.subr.mxu0 0.0
    %60 = vmatpush1.msra.mxu0 %v17
    %61 = vmatprep.subr.mxu0 0.0
    %62 = vmatpush1.msra.mxu0 %v16
    %63 = vmatprep.subr.mxu0 0.0
    %64 = vmatpush2.msra.mxu0 0.0
    %65 = vmatprep.subr.mxu0 0.0
    %66 = vmatpush2.msra.mxu0 0.0
    %67 = vmatprep.subr.mxu0 0.0
    %68 = vmatpush2.msra.mxu0 0.0
    %69 = vmatprep.subr.mxu0 0.0
    %70 = vmatpush2.msra.mxu0 0.0
    %71 = vmatprep.subr.mxu0 0.0
    %72 = vmatpush2.msra.mxu0 0.0
    %73 = vmatprep.subr.mxu0 0.0
    %74 = vmatpush2.msra.mxu0 0.0
    %75 = vmatprep.subr.mxu0 0.0
    %76 = vmatpush2.msra.mxu0 0.0
    %77 = vmatprep.subr.mxu0 0.0
    %78 = vmatpush2.msra.mxu0 0.0
    %79 = vmatprep.subr.mxu0 0.0
    %80 = vmatpush2.msra.mxu0 0.0
    %81 = vmatprep.subr.mxu0 0.0
    %82 = vmatpush2.msra.mxu0 0.0
    %83 = vmatprep.subr.mxu0 0.0
    %84 = vmatpush2.msra.mxu0 0.0
    %85 = vmatprep.subr.mxu0 0.0
    %86 = vmatpush2.msra.mxu0 0.0
    %87 = vmatprep.subr.mxu0 0.0
    %88 = vmatpush2.msra.mxu0 0.0
    %89 = vmatprep.subr.mxu0 0.0
    %90 = vmatpush2.msra.mxu0 0.0
    %91 = vmatprep.subr.mxu0 0.0
    %92 = vmatpush2.msra.mxu0 0.0
    %93 = vmatprep.subr.mxu0 0.0
    %94 = vmatpush2.msra.mxu0 0.0
    %95 = vmatprep.mubr.f32.mxu0 0.0
    %96 = vmatmul.mubr.f32.gmra.mxu0 %v29
    %v97 = vpop.f32.mrf.mxu0
    %v98 = vadd.f32 %v25, %v97
    %v99 = vpop.f32.mrf.mxu0
    %100 = vdwg.mxu0
    %vm101 = vcmask 130048
    %102 = vst.msk [vmem:[#allocation2] sm:$0xff] %vm101, %v98
    // Predicated region
    $region14: #{tpu_custom_call.1} parent=1 // pred_check
      _
    $region15: #{tpu_custom_call.1} parent=1 // pred_check_branch
      %104 = sbr.rel (0) target = $region17
    $region16: #{tpu_custom_call.1} parent=1 // pred_region
      %s106 = ssub.s32 128, 128
      %107 = vsyncadd [#allocation3], %s106
      %s109 = sshll.u32 [#allocation2], 4
      %s110 = int_to_ptr.vmem [resolvable:$true] %s109
      %112 = dma.vmem_to_hbm [thread:$0]  %s110, 128, %s3, [#allocation3]
    $region17: #{tpu_custom_call.1} parent=1 // pred_fallthru
      _
    // Predicated region
    $region18: #{tpu_custom_call.1} parent=1 // pred_check
      _
    $region19: #{tpu_custom_call.1} parent=1 // pred_check_branch
      %114 = sbr.rel (0) target = $region21
    $region20: #{tpu_custom_call.1} parent=1 // pred_region
      %115 = dma.done [#allocation3], 128
    $region21: #{tpu_custom_call.1} parent=1 // pred_fallthru
      _
    %116 = vsyncpa [#allocation3], 1

</llo_original>
